<compile_context>
chip_gen: v5e
topology: v5e:2x2
jax: 0.10.0
libtpu: 0.0.40
codegen_flags: <defaults>
</compile_context>

<pallas_src>
import jax
import jax.numpy as jnp
from jax import lax
from jax.experimental import pallas as pl
from jax.experimental.pallas import tpu as pltpu


def _shift4_kernel(x_ref, w_ref, b_ref, o_ref):
    # x_ref : (TM, K)       f32   rows of x
    # w_ref : (PAD, K)      f32   w1 zero-padded along output-feature axis
    # b_ref : (1, PAD)      f32   bias zero-padded
    # o_ref : (TM, PAD)     f32   lane-dense (PAD % 128 == 0) output
    #
    # y = x @ w.T  expressed as a dot_general contracting dim 1 of both operands
    # (no transpose materialized; MXU handles the transposed contraction).
    y = lax.dot_general(
        x_ref[...], w_ref[...],
        dimension_numbers=(((1,), (1,)), ((), ())),
        preferred_element_type=jnp.float32,
    )
    y = y + b_ref[...]
    # leaky_relu, PyTorch default negative_slope = 0.01: single VPU max.
    o_ref[...] = jnp.maximum(y, 0.01 * y)


def shift4_forward(x, w1, b1):
    """x: (N, out_dim); w1: (out_dim+1, out_dim); b1: (out_dim+1,)."""
    n, k = x.shape
    out_feat = w1.shape[0]          # out_dim + 1
    out_dim = out_feat - 1

    # Pad the output-feature axis up to a multiple of 128 so the kernel's
    # output store is lane-dense (unmasked vst). Zero rows / zero bias keep
    # the padded lanes inert (leaky_relu(0) == 0) and they are sliced off below.
    pad = ((out_feat + 127) // 128) * 128
    w_p = jnp.zeros((pad, k), dtype=jnp.float32).at[:out_feat, :].set(
        w1.astype(jnp.float32))
    b_p = jnp.zeros((1, pad), dtype=jnp.float32).at[0, :out_feat].set(
        b1.astype(jnp.float32))

    # Row tiling: full N for small inputs, 512-row blocks otherwise.
    # (512, 128) f32 out block = 256 KiB; double-buffered in/out blocks stay
    # far under the 32 MiB scoped VMEM default on v5e/v6e/v7x.
    tm = n if n <= 512 else 512
    grid = (pl.cdiv(n, tm),)

    y = pl.pallas_call(
        _shift4_kernel,
        out_shape=jax.ShapeDtypeStruct((n, pad), jnp.float32),
        grid=grid,
        in_specs=[
            pl.BlockSpec((tm, k), lambda i: (i, 0)),      # x rows
            pl.BlockSpec((pad, k), lambda i: (0, 0)),     # padded weight (invariant)
            pl.BlockSpec((1, pad), lambda i: (0, 0)),     # padded bias (invariant)
        ],
        out_specs=pl.BlockSpec((tm, pad), lambda i: (i, 0)),
        compiler_params=pltpu.CompilerParams(
            dimension_semantics=("parallel",),            # shard rows across TCs (v7x)
            vmem_limit_bytes=32 * 1024 * 1024,            # safe on v7x's 64 MiB VMEM
        ),
    )(x.astype(jnp.float32), w_p, b_p)

    # Column split (the x.T / slice / .T dance in PyTorch is just this split).
    x1 = y[:, :out_dim]            # (N, out_dim)
    x2 = y[:, out_dim:out_feat]    # (N, 1)
    return [x1, x2]


if __name__ == "__main__":
    # Small shapes consistent with the module: args.out_dim = 32, batch N = 8.
    out_dim = 32
    n = 8

    key = jax.random.PRNGKey(0)
    kx, kw = jax.random.split(key)

    # Deterministic parameter init matching nn.init.kaiming_normal_
    # (fan_in=out_dim, gain=sqrt(2)) for w1; zeros for b1.
    std = (2.0 / out_dim) ** 0.5
    w1 = std * jax.random.normal(kw, (out_dim + 1, out_dim), dtype=jnp.float32)
    b1 = jnp.zeros((out_dim + 1,), dtype=jnp.float32)

    x = jax.random.normal(kx, (n, out_dim), dtype=jnp.float32)

    x1, x2 = shift4_forward(x, w1, b1)
    jax.block_until_ready(x1)
    jax.block_until_ready(x2)

    # Pure-JAX reference check.
    y_ref = x @ w1.T + b1
    y_ref = jnp.where(y_ref > 0, y_ref, 0.01 * y_ref)
    assert x1.shape == (n, out_dim) and x2.shape == (n, 1)
    assert jnp.allclose(x1, y_ref[:, :out_dim], atol=1e-5, rtol=1e-5)
    assert jnp.allclose(x2, y_ref[:, out_dim:], atol=1e-5, rtol=1e-5)

    print("KERNEL_OK")
</pallas_src>

<mosaic_0001>
module attributes {stable_mosaic.version = 11 : i64} {
  func.func @_shift4_kernel(%arg0: i32, %arg1: memref<8x32xf32, #tpu.memory_space<vmem>>, %arg2: memref<128x32xf32, #tpu.memory_space<vmem>>, %arg3: memref<1x128xf32, #tpu.memory_space<vmem>>, %arg4: memref<8x128xf32, #tpu.memory_space<vmem>>) attributes {dimension_semantics = [#tpu.dimension_semantics<parallel>], iteration_bounds = array<i64: 1>, scalar_prefetch = 0 : i64, scratch_operands = 0 : i64, tpu.core_type = #tpu.core_type<tc>, window_params = [{transform_indices = @transform_0, window_bounds = array<i64: 8, 32>}, {pipeline_mode = #tpu.pipeline_mode<synchronous>, transform_indices = @transform_1, window_bounds = array<i64: 128, 32>}, {pipeline_mode = #tpu.pipeline_mode<synchronous>, transform_indices = @transform_2, window_bounds = array<i64: 1, 128>}, {transform_indices = @transform_3, window_bounds = array<i64: 8, 128>}]} {
    %c0 = arith.constant 0 : index
    %c0_0 = arith.constant 0 : index
    %0 = vector.load %arg1[%c0, %c0_0] : memref<8x32xf32, #tpu.memory_space<vmem>>, vector<8x32xf32>
    %c0_1 = arith.constant 0 : index
    %c0_2 = arith.constant 0 : index
    %1 = vector.load %arg2[%c0_1, %c0_2] : memref<128x32xf32, #tpu.memory_space<vmem>>, vector<128x32xf32>
    %cst = arith.constant dense<0.000000e+00> : vector<8x128xf32>
    %2 = tpu.matmul %0, %1, %cst {dimension_numbers = #tpu.dot_dimension_numbers<[1], [1], [0], [0], [0, 0, 1, 0], [], []>} : vector<8x32xf32>, vector<128x32xf32>, vector<8x128xf32> -> vector<8x128xf32>
    %c0_3 = arith.constant 0 : index
    %c0_4 = arith.constant 0 : index
    %3 = vector.load %arg3[%c0_3, %c0_4] : memref<1x128xf32, #tpu.memory_space<vmem>>, vector<1x128xf32>
    %4 = vector.broadcast %3 : vector<1x128xf32> to vector<8x128xf32>
    %5 = arith.addf %2, %4 : vector<8x128xf32>
    %cst_5 = arith.constant 0.00999999977 : f32
    %6 = vector.broadcast %cst_5 : f32 to vector<8x128xf32>
    %7 = arith.mulf %6, %5 : vector<8x128xf32>
    %8 = arith.maximumf %5, %7 : vector<8x128xf32>
    %c0_6 = arith.constant 0 : index
    %c0_7 = arith.constant 0 : index
    %9 = vector.load %arg4[%c0_6, %c0_7] : memref<8x128xf32, #tpu.memory_space<vmem>>, vector<8x128xf32>
    tpu.vector_store %arg4[%c0_6, %c0_7], %8 {strides = array<i32>} : memref<8x128xf32, #tpu.memory_space<vmem>>, vector<8x128xf32>,
    return
  }
  func.func @transform_0(%arg0: i32) -> (i32, i32) {
    %c0_i32 = arith.constant 0 : i32
    %c0_i32_0 = arith.constant 0 : i32
    return %arg0, %c0_i32 : i32, i32
  }
  func.func @transform_1(%arg0: i32) -> (i32, i32) {
    %c0_i32 = arith.constant 0 : i32
    %c0_i32_0 = arith.constant 0 : i32
    %c0_i32_1 = arith.constant 0 : i32
    return %c0_i32, %c0_i32_0 : i32, i32
  }
  func.func @transform_2(%arg0: i32) -> (i32, i32) {
    %c0_i32 = arith.constant 0 : i32
    %c0_i32_0 = arith.constant 0 : i32
    %c0_i32_1 = arith.constant 0 : i32
    return %c0_i32, %c0_i32_0 : i32, i32
  }
  func.func @transform_3(%arg0: i32) -> (i32, i32) {
    %c0_i32 = arith.constant 0 : i32
    %c0_i32_0 = arith.constant 0 : i32
    return %arg0, %c0_i32 : i32, i32
  }
}

</mosaic_0001>

<llo_original>
// kernel: tpu_custom_call.1
$region0: #{tpu_custom_call.1}
  #allocation0 [shape = 'u32[]', space=smem, size = 0x4, offset = 0x4, fixed_abs, tag = 'smem constant byte address 0x4 - core index']
  #allocation1 [shape = 'u32[72,128]{1,0:T(1,128)}', space=vmem, size = 0x9000, scoped, tag = 'internal scratch']
  %s0 = inlined_call_operand.vmem [shape: f32[8,32], index: 0, kind: input, shape index: {}]
  %s1 = inlined_call_operand.vmem [shape: f32[128,32], index: 1, kind: input, shape index: {}]
  %s2 = inlined_call_operand.vmem [shape: f32[1,128], index: 2, kind: input, shape index: {}]
  %s3 = inlined_call_operand.hbm [shape: f32[8,128], index: 3, kind: output, shape index: {}]
  %s4 = sld [smem:[#allocation0]]
  $region22: #{tpu_custom_call.1} parent=0
    _
  %s6 = ssub.s32 1, %s4
  %s7 = scalar_select 0, %s6, %s4
  $region1: #{tpu_custom_call.1} parent=0
    #allocation2 [shape = 'u8[4096]{0}', space=vmem, size = 0x1000, scoped, tag = 'output window, operand 0, single buffered']
    #allocation3 [shape = 's32[1]{0}', space=sflag, size = 0x4, scoped, tag = 'scoped memory for tpu_custom_call.1']
    %8 = vsyncpa [#allocation3], 0
    // Predicated region
    $region2: #{tpu_custom_call.1} parent=1 // pred_check
      _
    $region3: #{tpu_custom_call.1} parent=1 // pred_check_branch
      %10 = sbr.rel (0) target = $region5
    $region4: #{tpu_custom_call.1} parent=1 // pred_region
      _
    $region5: #{tpu_custom_call.1} parent=1 // pred_fallthru
      _
    // Predicated region
    $region6: #{tpu_custom_call.1} parent=1 // pred_check
      _
    $region7: #{tpu_custom_call.1} parent=1 // pred_check_branch
      %12 = sbr.rel (0) target = $region9
    $region8: #{tpu_custom_call.1} parent=1 // pred_region
      _
    $region9: #{tpu_custom_call.1} parent=1 // pred_fallthru
      _
    // Predicated region
    $region10: #{tpu_custom_call.1} parent=1 // pred_check
      _
    $region11: #{tpu_custom_call.1} parent=1 // pred_check_branch
      %14 = sbr.rel (0) target = $region13
    $region12: #{tpu_custom_call.1} parent=1 // pred_region
      _
    $region13: #{tpu_custom_call.1} parent=1 // pred_fallthru
      _
    %v15 = vld [vmem:[%s0] sm:$0xff]
    %v16 = vld [vmem:[%s1] sm:$0xff]
    %v17 = vld [vmem:[%s1 + $0x8] sm:$0xff]
    %v18 = vld [vmem:[%s1 + $0x10] sm:$0xff]
    %v19 = vld [vmem:[%s1 + $0x18] sm:$0xff]
    %v20 = vld [vmem:[%s1 + $0x20] sm:$0xff]
    %v21 = vld [vmem:[%s1 + $0x28] sm:$0xff]
    %v22 = vld [vmem:[%s1 + $0x30] sm:$0xff]
    %v23 = vld [vmem:[%s1 + $0x38] sm:$0xff]
    %v24 = vld [vmem:[%s1 + $0x40] sm:$0xff]
    %v25 = vld [vmem:[%s1 + $0x48] sm:$0xff]
    %v26 = vld [vmem:[%s1 + $0x50] sm:$0xff]
    %v27 = vld [vmem:[%s1 + $0x58] sm:$0xff]
    %v28 = vld [vmem:[%s1 + $0x60] sm:$0xff]
    %v29 = vld [vmem:[%s1 + $0x68] sm:$0xff]
    %v30 = vld [vmem:[%s1 + $0x70] sm:$0xff]
    %v31 = vld [vmem:[%s1 + $0x78] sm:$0xff]
    %v32 = vld [vmem:[%s2] sm:$0x1]
    %v34 = vperm.slane %v32, 0
    %vm36 = vcmask 261120
    %v38 = vsel %vm36, %v15, 0
    %v41 = vsel %vm36, %v16, 0
    %v44 = vsel %vm36, %v17, 0
    %v47 = vsel %vm36, %v18, 0
    %v50 = vsel %vm36, %v19, 0
    %v53 = vsel %vm36, %v20, 0
    %v56 = vsel %vm36, %v21, 0
    %v59 = vsel %vm36, %v22, 0
    %v62 = vsel %vm36, %v23, 0
    %v65 = vsel %vm36, %v24, 0
    %v68 = vsel %vm36, %v25, 0
    %v71 = vsel %vm36, %v26, 0
    %v74 = vsel %vm36, %v27, 0
    %v77 = vsel %vm36, %v28, 0
    %v80 = vsel %vm36, %v29, 0
    %v83 = vsel %vm36, %v30, 0
    %v86 = vsel %vm36, %v31, 0
    %88 = vmatpush.xpose.msra.mxu0 %v86
    %89 = vmatpush.xpose.msra.mxu0 %v83
    %90 = vmatpush.xpose.msra.mxu0 %v80
    %91 = vmatpush.xpose.msra.mxu0 %v77
    %92 = vmatpush.xpose.msra.mxu0 %v74
    %93 = vmatpush.xpose.msra.mxu0 %v71
    %94 = vmatpush.xpose.msra.mxu0 %v68
    %95 = vmatpush.xpose.msra.mxu0 %v65
    %96 = vmatpush.xpose.msra.mxu0 %v62
    %97 = vmatpush.xpose.msra.mxu0 %v59
    %98 = vmatpush.xpose.msra.mxu0 %v56
    %99 = vmatpush.xpose.msra.mxu0 %v53
    %100 = vmatpush.xpose.msra.mxu0 %v50
    %101 = vmatpush.xpose.msra.mxu0 %v47
    %102 = vmatpush.xpose.msra.mxu0 %v44
    %103 = vmatpush.xpose.msra.mxu0 %v41
    %104 = vmatmul.f32.gmra.mxu0 %v38
    %v105 = vpop.f32.mrf.mxu0
    %v106 = vadd.f32 %v34, %v105
    %107 = vdwg.mxu0
    %v108 = vmul.f32 %v106, 0.01
    %v109 = vmax.f32 %v106, %v108
    %110 = vst [vmem:[#allocation2] sm:$0xff] %v109
    // Predicated region
    $region14: #{tpu_custom_call.1} parent=1 // pred_check
      _
    $region15: #{tpu_custom_call.1} parent=1 // pred_check_branch
      %112 = sbr.rel (0) target = $region17
    $region16: #{tpu_custom_call.1} parent=1 // pred_region
      %114 = vsyncadd [#allocation3], 0
      %s116 = sshll.u32 [#allocation2], 4
      %s117 = int_to_ptr.vmem [resolvable:$true] %s116
      %s118 = sshll.u32 %s3, 4
      %s119 = int_to_ptr.hbm [resolvable:$true] %s118
      %121 = dma.vmem_to_hbm [thread:$0]  %s117, 128, %s119, [#allocation3]
    $region17: #{tpu_custom_call.1} parent=1 // pred_fallthru
      _
    // Predicated region
    $region18: #{tpu_custom_call.1} parent=1 // pred_check
      _
    $region19: #{tpu_custom_call.1} parent=1 // pred_check_branch
      %123 = sbr.rel (0) target = $region21
    $region20: #{tpu_custom_call.1} parent=1 // pred_region
      %125 = dma.done [#allocation3], 128
    $region21: #{tpu_custom_call.1} parent=1 // pred_fallthru
      _
    %126 = vsyncpa [#allocation3], 1

</llo_original>
